<compile_context>
chip_gen: v7x
topology: tpu7x:2x2x1
jax: 0.10.0
libtpu: 0.0.40
codegen_flags: <defaults>
</compile_context>

<pallas_src>
import jax
import jax.numpy as jnp
from jax import lax
from jax.experimental import pallas as pl
from jax.experimental.pallas import tpu as pltpu


_ACC_TARGET_BYTES = 1 << 20   # ~1 MiB f32 accumulator / output block per grid step


def _local_linear_kernel(u_ref, w_ref, b_ref, o_ref):
    """One (batch-tile x fold-tile) block of the locally-connected matmul.

    u_ref: (BS, K, TF)   unfolded input taps   (fold dim on lanes)
    w_ref: (K,  L, TF)   weight, tap-major     (fold dim on lanes)
    b_ref: (L,  TF)      bias                  (fold dim on lanes)
    o_ref: (BS, L, TF)   output block          (fold dim on lanes, lane-dense)
    """
    bs, num_taps, tf = u_ref.shape
    local_features = w_ref.shape[1]

    # Fused bias add: start the f32 accumulator from the broadcast bias.
    acc = jnp.broadcast_to(
        b_ref[...].astype(jnp.float32)[None, :, :], (bs, local_features, tf))

    # kernel_size is small and static -> fully unrolled VPU broadcast-FMA sweep.
    # Slice one tap / one weight plane per iteration straight from the refs so
    # only the active tap is widened to f32 (keeps live vregs ~O(one acc block)).
    for k in range(num_taps):
        tap = u_ref[:, k:k + 1, :].astype(jnp.float32)     # (BS, 1, TF): sublane bcast
        w_k = w_ref[k].astype(jnp.float32)                 # (L, TF): reused across BS
        acc = acc + tap * w_k[None, :, :]

    o_ref[...] = acc.astype(o_ref.dtype)


def _choose_fold_tile(fold_num):
    """Lane-dense fold tile: a multiple of 128 dividing fold_num, else the full axis."""
    if fold_num > 512:
        for tf in (512, 384, 256, 128):
            if fold_num % tf == 0:
                return tf
    return fold_num


def _choose_batch_tile(batch, local_features, fold_tile, num_fold_tiles):
    """Largest batch tile with ~_ACC_TARGET_BYTES of f32 accumulator; >= 2 grid steps."""
    b8 = -(-batch // 8) * 8                                # pad tiny batches to 8 rows
    bs = (_ACC_TARGET_BYTES // (4 * local_features * fold_tile)) // 8 * 8
    bs = max(8, min(512, bs, b8))
    # v7x megacore: keep at least two "parallel" grid steps whenever possible.
    if num_fold_tiles * (-(-b8 // bs)) < 2 and b8 >= 16:
        bs = max(8, (b8 // 2) // 8 * 8)
    b_pad = -(-b8 // bs) * bs
    return bs, b_pad


def local_linear(x, weight, bias=None, *, kernel_size, stride=1, padding=0,
                 batch_tile=None, fold_tile=None):
    """x: (B, in_features); weight: (fold_num, kernel_size, local_features);
    bias: (fold_num, local_features) or None.  Returns (B, fold_num, local_features)."""
    B, in_features = x.shape
    fold_num, k_w, local_features = weight.shape
    assert k_w == kernel_size
    padded_features = in_features + 2 * padding
    assert (padded_features - kernel_size) // stride + 1 == fold_num
    K, L, F = kernel_size, local_features, fold_num

    if bias is None:
        bias = jnp.zeros((F, L), x.dtype)

    # F.pad + unfold hoisted out of the kernel: u[b, k, f] = x_pad[b, f*stride + k].
    # Handles any stride without strided lane slices inside the kernel, and puts
    # the fold dim on lanes to match the accumulator layout (no per-tap relayout).
    x_pad = jnp.pad(x, ((0, 0), (padding, padding)))
    tap_idx = jnp.arange(K)[:, None] + jnp.arange(F)[None, :] * stride
    u = x_pad[:, tap_idx]                                  # (B, K, F)

    w_kf = jnp.transpose(weight, (1, 2, 0))                # (K, L, F)
    b_f = jnp.transpose(bias, (1, 0))                      # (L, F)

    tf = fold_tile if fold_tile is not None else _choose_fold_tile(F)
    assert F % tf == 0
    nf = F // tf
    if batch_tile is not None:
        bs = max(8, batch_tile - batch_tile % 8)
        b_pad = -(-B // bs) * bs
    else:
        bs, b_pad = _choose_batch_tile(B, L, tf, nf)
    if b_pad != B:
        u = jnp.pad(u, ((0, b_pad - B), (0, 0), (0, 0)))
    nb = b_pad // bs

    out_lane_major = pl.pallas_call(
        _local_linear_kernel,
        out_shape=jax.ShapeDtypeStruct((b_pad, L, F), x.dtype),
        grid_spec=pltpu.PrefetchScalarGridSpec(
            num_scalar_prefetch=0,
            # Batch innermost: weight/bias block index is unchanged across the
            # inner loop, so their DMAs are skipped there.  Both axes "parallel".
            grid=(nf, nb),
            in_specs=[
                pl.BlockSpec((bs, K, tf), lambda f, b: (b, 0, f)),     # taps
                # Batch-invariant blocks; small, so default double-buffering is
                # harmless (pipeline_mode=pl.Buffered(1) would shave one copy).
                pl.BlockSpec((K, L, tf), lambda f, b: (0, 0, f)),      # weight
                pl.BlockSpec((L, tf), lambda f, b: (0, f)),            # bias
            ],
            out_specs=pl.BlockSpec((bs, L, tf), lambda f, b: (b, 0, f)),
        ),
        compiler_params=pltpu.CompilerParams(
            dimension_semantics=("parallel", "parallel"),
            vmem_limit_bytes=48 * 1024 * 1024,   # > 16/32 MiB defaults, < v7x's 64 MiB
        ),
    )(u, w_kf, b_f)

    # Back to the PyTorch (B, fold_num, local_features) layout.  Consumers that can
    # take the lane-dense (B, L, F) layout directly should skip this transpose.
    return jnp.transpose(out_lane_major[:B], (0, 2, 1))


def reference_local_linear(x, weight, bias, *, kernel_size, stride=1, padding=0):
    """Pure-JAX reference mirroring the PyTorch forward exactly."""
    x = jnp.pad(x, ((0, 0), (padding, padding)))
    fold_num = (x.shape[1] - kernel_size) // stride + 1
    idx = jnp.arange(fold_num)[:, None] * stride + jnp.arange(kernel_size)[None, :]
    u = x[:, idx]                                          # (B, fold_num, K)
    y = jnp.einsum("bfk,fkl->bfl", u, weight, precision=lax.Precision.HIGHEST)
    if bias is not None:
        y = y + bias[None, :, :]
    return y


if __name__ == "__main__":
    key = jax.random.PRNGKey(0)
    configs = [
        dict(B=16, in_features=16, local_features=32, kernel_size=3, padding=1, stride=1),
        dict(B=2, in_features=16, local_features=8, kernel_size=5, padding=0, stride=1),
        dict(B=32, in_features=32, local_features=16, kernel_size=4, padding=2, stride=2),
        dict(B=8, in_features=640, local_features=8, kernel_size=3, padding=1, stride=1),
    ]
    for cfg in configs:
        key, kx, kw, kb = jax.random.split(key, 4)
        fold_num = (cfg["in_features"] + 2 * cfg["padding"]
                    - cfg["kernel_size"]) // cfg["stride"] + 1
        x = jax.random.normal(kx, (cfg["B"], cfg["in_features"]), jnp.float32)
        weight = jax.random.normal(
            kw, (fold_num, cfg["kernel_size"], cfg["local_features"]), jnp.float32)
        bias = jax.random.normal(kb, (fold_num, cfg["local_features"]), jnp.float32)

        out = local_linear(x, weight, bias, kernel_size=cfg["kernel_size"],
                           stride=cfg["stride"], padding=cfg["padding"])
        out = jax.block_until_ready(out)

        ref = reference_local_linear(x, weight, bias, kernel_size=cfg["kernel_size"],
                                     stride=cfg["stride"], padding=cfg["padding"])
        assert out.shape == (cfg["B"], fold_num, cfg["local_features"]), out.shape
        assert jnp.allclose(out, ref, atol=1e-5, rtol=1e-5), jnp.max(jnp.abs(out - ref))

    print("KERNEL_OK")
</pallas_src>

<mosaic_0001>
module attributes {stable_mosaic.version = 11 : i64} {
  func.func @_local_linear_kernel(%arg0: i32, %arg1: i32, %arg2: memref<8x3x16xf32, #tpu.memory_space<vmem>>, %arg3: memref<3x32x16xf32, #tpu.memory_space<vmem>>, %arg4: memref<32x16xf32, #tpu.memory_space<vmem>>, %arg5: memref<8x32x16xf32, #tpu.memory_space<vmem>>) attributes {dimension_semantics = [#tpu.dimension_semantics<parallel>, #tpu.dimension_semantics<parallel>], iteration_bounds = array<i64: 1, 2>, scalar_prefetch = 0 : i64, scratch_operands = 0 : i64, tpu.core_type = #tpu.core_type<tc>, window_params = [{transform_indices = @transform_0, window_bounds = array<i64: 8, 3, 16>}, {transform_indices = @transform_1, window_bounds = array<i64: 3, 32, 16>}, {transform_indices = @transform_2, window_bounds = array<i64: 32, 16>}, {transform_indices = @transform_3, window_bounds = array<i64: 8, 32, 16>}]} {
    %c0 = arith.constant 0 : index
    %c0_0 = arith.constant 0 : index
    %0 = vector.load %arg4[%c0, %c0_0] : memref<32x16xf32, #tpu.memory_space<vmem>>, vector<32x16xf32>
    %1 = vector.shape_cast %0 : vector<32x16xf32> to vector<1x32x16xf32>
    %2 = vector.shape_cast %1 : vector<1x32x16xf32> to vector<1x32x16xf32>
    %3 = vector.broadcast %2 : vector<1x32x16xf32> to vector<8x32x16xf32>
    %c0_1 = arith.constant 0 : index
    %c0_2 = arith.constant 0 : index
    %c0_3 = arith.constant 0 : index
    %4 = vector.load %arg2[%c0_1, %c0_2, %c0_3] : memref<8x3x16xf32, #tpu.memory_space<vmem>>, vector<8x1x16xf32>
    %c0_4 = arith.constant 0 : index
    %c0_5 = arith.constant 0 : index
    %c0_6 = arith.constant 0 : index
    %5 = vector.load %arg3[%c0_4, %c0_5, %c0_6] : memref<3x32x16xf32, #tpu.memory_space<vmem>>, vector<1x32x16xf32>
    %6 = vector.shape_cast %5 : vector<1x32x16xf32> to vector<32x16xf32>
    %7 = vector.shape_cast %6 : vector<32x16xf32> to vector<1x32x16xf32>
    %8 = vector.broadcast %4 : vector<8x1x16xf32> to vector<8x32x16xf32>
    %9 = vector.broadcast %7 : vector<1x32x16xf32> to vector<8x32x16xf32>
    %10 = arith.mulf %8, %9 : vector<8x32x16xf32>
    %11 = arith.addf %3, %10 : vector<8x32x16xf32>
    %c0_7 = arith.constant 0 : index
    %c1 = arith.constant 1 : index
    %c0_8 = arith.constant 0 : index
    %12 = vector.load %arg2[%c0_7, %c1, %c0_8] : memref<8x3x16xf32, #tpu.memory_space<vmem>>, vector<8x1x16xf32>
    %c1_9 = arith.constant 1 : index
    %c0_10 = arith.constant 0 : index
    %c0_11 = arith.constant 0 : index
    %13 = vector.load %arg3[%c1_9, %c0_10, %c0_11] : memref<3x32x16xf32, #tpu.memory_space<vmem>>, vector<1x32x16xf32>
    %14 = vector.shape_cast %13 : vector<1x32x16xf32> to vector<32x16xf32>
    %15 = vector.shape_cast %14 : vector<32x16xf32> to vector<1x32x16xf32>
    %16 = vector.broadcast %12 : vector<8x1x16xf32> to vector<8x32x16xf32>
    %17 = vector.broadcast %15 : vector<1x32x16xf32> to vector<8x32x16xf32>
    %18 = arith.mulf %16, %17 : vector<8x32x16xf32>
    %19 = arith.addf %11, %18 : vector<8x32x16xf32>
    %c0_12 = arith.constant 0 : index
    %c2 = arith.constant 2 : index
    %c0_13 = arith.constant 0 : index
    %20 = vector.load %arg2[%c0_12, %c2, %c0_13] : memref<8x3x16xf32, #tpu.memory_space<vmem>>, vector<8x1x16xf32>
    %c2_14 = arith.constant 2 : index
    %c0_15 = arith.constant 0 : index
    %c0_16 = arith.constant 0 : index
    %21 = vector.load %arg3[%c2_14, %c0_15, %c0_16] : memref<3x32x16xf32, #tpu.memory_space<vmem>>, vector<1x32x16xf32>
    %22 = vector.shape_cast %21 : vector<1x32x16xf32> to vector<32x16xf32>
    %23 = vector.shape_cast %22 : vector<32x16xf32> to vector<1x32x16xf32>
    %24 = vector.broadcast %20 : vector<8x1x16xf32> to vector<8x32x16xf32>
    %25 = vector.broadcast %23 : vector<1x32x16xf32> to vector<8x32x16xf32>
    %26 = arith.mulf %24, %25 : vector<8x32x16xf32>
    %27 = arith.addf %19, %26 : vector<8x32x16xf32>
    %c0_17 = arith.constant 0 : index
    %c0_18 = arith.constant 0 : index
    %c0_19 = arith.constant 0 : index
    %28 = vector.load %arg5[%c0_17, %c0_18, %c0_19] : memref<8x32x16xf32, #tpu.memory_space<vmem>>, vector<8x32x16xf32>
    tpu.vector_store %arg5[%c0_17, %c0_18, %c0_19], %27 {strides = array<i32>} : memref<8x32x16xf32, #tpu.memory_space<vmem>>, vector<8x32x16xf32>,
    return
  }
  func.func @transform_0(%arg0: i32, %arg1: i32) -> (i32, i32, i32) {
    %c0_i32 = arith.constant 0 : i32
    %c0_i32_0 = arith.constant 0 : i32
    return %arg1, %c0_i32, %arg0 : i32, i32, i32
  }
  func.func @transform_1(%arg0: i32, %arg1: i32) -> (i32, i32, i32) {
    %c0_i32 = arith.constant 0 : i32
    %c0_i32_0 = arith.constant 0 : i32
    %c0_i32_1 = arith.constant 0 : i32
    return %c0_i32, %c0_i32_0, %arg0 : i32, i32, i32
  }
  func.func @transform_2(%arg0: i32, %arg1: i32) -> (i32, i32) {
    %c0_i32 = arith.constant 0 : i32
    %c0_i32_0 = arith.constant 0 : i32
    return %c0_i32, %arg0 : i32, i32
  }
  func.func @transform_3(%arg0: i32, %arg1: i32) -> (i32, i32, i32) {
    %c0_i32 = arith.constant 0 : i32
    %c0_i32_0 = arith.constant 0 : i32
    return %arg1, %c0_i32, %arg0 : i32, i32, i32
  }
}

</mosaic_0001>

<llo_original>
// kernel: tpu_custom_call.1
$region0: #{tpu_custom_call.1}
  #allocation0 [shape = 'u32[]', space=smem, size = 0x4, offset = 0x4, fixed_abs, tag = 'smem constant byte address 0x4 - core index']
  #allocation1 [shape = 'u32[144,128]{1,0:T(1,128)}', space=vmem, size = 0x12000, scoped, tag = 'internal scratch']
  %s0 = inlined_call_operand.vmem [shape: f32[16,3,16], index: 0, kind: input, shape index: {}]
  %s1 = inlined_call_operand.vmem [shape: f32[3,32,16], index: 1, kind: input, shape index: {}]
  %s2 = inlined_call_operand.vmem [shape: f32[32,16], index: 2, kind: input, shape index: {}]
  %s3 = inlined_call_operand.vmem [shape: f32[16,32,16], index: 3, kind: output, shape index: {}]
  %s4 = sld [smem:[#allocation0]]
  $region45: #{tpu_custom_call.1} parent=0
    _
  %s6 = ssub.s32 1, %s4
  %s7 = scalar_select 0, %s6, %s4
  loop: start=0, step=1, limit=4
  $region2: #{tpu_custom_call.1} parent=0 // loop_pre_header
    _
  $region3: #{tpu_custom_call.1} parent=0 // loop_header
    %s9 = sphi 0, %s13
    %p10 = scmp.ge.s32.totalorder %s9, 4
    %s16 = sphi 0, %s28
    %s17 = sphi 0, %s24
    %s18 = sphi 0, %s16
    %s19 = sphi 0, %s17
    %s20 = sphi 0, %s18
    %s21 = sphi 0, %s19
    %s33 = sphi 0, %s35
    %s36 = sphi 0, %s33
    %s37 = sphi 0, %s36
    %s53 = sphi 0, %s37
    %s59 = sphi 0, %s61
    %s62 = sphi 0, %s59
    %s63 = sphi 0, %s62
    %s79 = sphi 0, %s63
    %s85 = sphi 0, %s87
    %s88 = sphi 0, %s85
    %s89 = sphi 0, %s88
    %s105 = sphi 0, %s89
    %s113 = sphi 0, %s115
    %s116 = sphi 0, %s113
    %s117 = sphi 0, %s116
    %s133 = sphi 0, %s117
  $region4: #{tpu_custom_call.1} parent=0 // loop_header_branch
    %12 = sbr.rel (%p10) target = $region8
  $region5: #{tpu_custom_call.1} parent=0 // loop_body
    %s14 = ssub.s32 %s9, 1
    %s15 = ssub.s32 %s9, 2
    %s22 = sadd.s32 1, %s17
    %p23 = scmp.ge.s32.totalorder %s22, 2
    %s24 = scalar_select %p23, 0, %s22
    %s25 = sadd.s32 1, %s16
    %s26 = scalar_select %p23, %s25, %s16
    %p27 = scmp.ge.s32.totalorder %s26, 1
    %s28 = scalar_select %p27, 0, %s26
    %s29 = ssub.s32 %s17, %s24
    %s30 = ssub.s32 %s16, %s28
    %s31 = sor.u32 %s29, %s30
    %p32 = scmp.eq.s32.totalorder %s31, 0
    %s34 = sadd.s32 %s33, 1
    %s35 = scalar_select %p32, %s33, %s34
    %p38 = pneg %p32
    %p39 = scmp.eq.s32.totalorder %s9, 1
    %p40 = por %p38, %p39
    %p41 = scmp.ne.s32.totalorder %s33, %s36
    %p42 = scmp.eq.s32.totalorder %s9, 0
    %p43 = por %p41, %p42
    %p44 = scmp.ne.s32.totalorder %s33, %s36
    %p45 = scmp.eq.s32.totalorder %s14, 1
    %p46 = por %p44, %p45
    %p47 = scmp.ne.s32.totalorder %s36, %s37
    %p48 = scmp.eq.s32.totalorder %s14, 0
    %p49 = por %p47, %p48
    %p50 = scmp.ne.s32.totalorder %s36, %s37
    %p51 = scmp.eq.s32.totalorder %s15, 1
    %p52 = por %p50, %p51
    %p54 = scmp.ne.s32.totalorder %s37, %s53
    %p55 = scmp.eq.s32.totalorder %s15, 0
    %p56 = por %p54, %p55
    %s57 = ssub.s32 %s16, %s28
    %p58 = scmp.eq.s32.totalorder %s57, 0
    %s60 = sadd.s32 %s59, 1
    %s61 = scalar_select %p58, %s59, %s60
    %p64 = pneg %p58
    %p65 = scmp.eq.s32.totalorder %s9, 1
    %p66 = por %p64, %p65
    %p67 = scmp.ne.s32.totalorder %s59, %s62
    %p68 = scmp.eq.s32.totalorder %s9, 0
    %p69 = por %p67, %p68
    %p70 = scmp.ne.s32.totalorder %s59, %s62
    %p71 = scmp.eq.s32.totalorder %s14, 1
    %p72 = por %p70, %p71
    %p73 = scmp.ne.s32.totalorder %s62, %s63
    %p74 = scmp.eq.s32.totalorder %s14, 0
    %p75 = por %p73, %p74
    %p76 = scmp.ne.s32.totalorder %s62, %s63
    %p77 = scmp.eq.s32.totalorder %s15, 1
    %p78 = por %p76, %p77
    %p80 = scmp.ne.s32.totalorder %s63, %s79
    %p81 = scmp.eq.s32.totalorder %s15, 0
    %p82 = por %p80, %p81
    %s83 = ssub.s32 %s16, %s28
    %p84 = scmp.eq.s32.totalorder %s83, 0
    %s86 = sadd.s32 %s85, 1
    %s87 = scalar_select %p84, %s85, %s86
    %p90 = pneg %p84
    %p91 = scmp.eq.s32.totalorder %s9, 1
    %p92 = por %p90, %p91
    %p93 = scmp.ne.s32.totalorder %s85, %s88
    %p94 = scmp.eq.s32.totalorder %s9, 0
    %p95 = por %p93, %p94
    %p96 = scmp.ne.s32.totalorder %s85, %s88
    %p97 = scmp.eq.s32.totalorder %s14, 1
    %p98 = por %p96, %p97
    %p99 = scmp.ne.s32.totalorder %s88, %s89
    %p100 = scmp.eq.s32.totalorder %s14, 0
    %p101 = por %p99, %p100
    %p102 = scmp.ne.s32.totalorder %s88, %s89
    %p103 = scmp.eq.s32.totalorder %s15, 1
    %p104 = por %p102, %p103
    %p106 = scmp.ne.s32.totalorder %s89, %s105
    %p107 = scmp.eq.s32.totalorder %s15, 0
    %p108 = por %p106, %p107
    %s109 = ssub.s32 %s17, %s24
    %s110 = ssub.s32 %s16, %s28
    %s111 = sor.u32 %s109, %s110
    %p112 = scmp.eq.s32.totalorder %s111, 0
    %s114 = sadd.s32 %s113, 1
    %s115 = scalar_select %p112, %s113, %s114
    %p118 = pneg %p112
    %p119 = scmp.eq.s32.totalorder %s9, 1
    %p120 = por %p118, %p119
    %p121 = scmp.ne.s32.totalorder %s113, %s116
    %p122 = scmp.eq.s32.totalorder %s9, 0
    %p123 = por %p121, %p122
    %p124 = scmp.ne.s32.totalorder %s113, %s116
    %p125 = scmp.eq.s32.totalorder %s14, 1
    %p126 = por %p124, %p125
    %p127 = scmp.ne.s32.totalorder %s116, %s117
    %p128 = scmp.eq.s32.totalorder %s14, 0
    %p129 = por %p127, %p128
    %p130 = scmp.ne.s32.totalorder %s116, %s117
    %p131 = scmp.eq.s32.totalorder %s15, 1
    %p132 = por %p130, %p131
    %p134 = scmp.ne.s32.totalorder %s117, %s133
    %p135 = scmp.eq.s32.totalorder %s15, 0
    %p136 = por %p134, %p135
    %p137 = scmp.le.s32.totalorder 1, %s9
    %p138 = scmp.lt.s32.totalorder %s9, 3
    %p139 = pnand %p137, %p138
    %p140 = pneg %p139
    // Predicated region
    $region9: #{tpu_custom_call.1} parent=5 // pred_check
      _
    $region10: #{tpu_custom_call.1} parent=5 // pred_check_branch
      %142 = sbr.rel (%p139) target = $region12
    $region11: #{tpu_custom_call.1} parent=5 // pred_region
      %s143 = ssub.s32 %s9, 1
      // Predicated region
      $region13: #{tpu_custom_call.1} parent=11 // pred_check
        %p144 = pneg %p75
      $region14: #{tpu_custom_call.1} parent=11 // pred_check_branch
        %146 = sbr.rel (%p144) target = $region16
      $region15: #{tpu_custom_call.1} parent=11 // pred_region
        %p147 = scmp.lt.s32.totalorder %s18, 0
        %s148 = scalar_select %p147, %s18, 0
        %s149 = smul.addr %s148, 8
        %s150 = scalar_lea.vmem %s1, %s149
      $region16: #{tpu_custom_call.1} parent=11 // pred_fallthru
        _
      // Predicated region
      $region17: #{tpu_custom_call.1} parent=11 // pred_check
        %p151 = pneg %p101
      $region18: #{tpu_custom_call.1} parent=11 // pred_check_branch
        %153 = sbr.rel (%p151) target = $region20
      $region19: #{tpu_custom_call.1} parent=11 // pred_region
        %p154 = scmp.lt.s32.totalorder %s18, 0
        %s155 = scalar_select %p154, %s18, 0
        %s156 = smul.addr %s155, 8
        %s157 = scalar_lea.vmem %s2, %s156
      $region20: #{tpu_custom_call.1} parent=11 // pred_fallthru
        _
    $region12: #{tpu_custom_call.1} parent=5 // pred_fallthru
      _
    %p158 = scmp.lt.s32.totalorder %s9, 2
    // Predicated region
    $region21: #{tpu_custom_call.1} parent=5 // pred_check
      %p159 = pneg %p158
    $region22: #{tpu_custom_call.1} parent=5 // pred_check_branch
      %161 = sbr.rel (%p159) target = $region24
    $region23: #{tpu_custom_call.1} parent=5 // pred_region
      // Predicated region
      $region25: #{tpu_custom_call.1} parent=23 // pred_check
        %p162 = pneg %p43
      $region26: #{tpu_custom_call.1} parent=23 // pred_check_branch
        %164 = sbr.rel (%p162) target = $region28
      $region27: #{tpu_custom_call.1} parent=23 // pred_region
        %s165 = smul.u32 8, %s17
        %p166 = scmp.lt.s32.totalorder %s165, 15
        %s167 = scalar_select %p166, %s165, 15
        %p168 = scmp.lt.s32.totalorder %s16, 0
        %s169 = scalar_select %p168, %s16, 0
        %s170 = sadd.s32 %s169, %s167
        %s171 = smul.addr %s170, 4
        %s172 = scalar_lea.vmem %s0, %s171
        %s173 = smul.u32 8, %s17
      $region28: #{tpu_custom_call.1} parent=23 // pred_fallthru
        _
    $region24: #{tpu_custom_call.1} parent=5 // pred_fallthru
      _
    %p174 = scmp.le.s32.totalorder 1, %s9
    %p175 = scmp.lt.s32.totalorder %s9, 3
    %p176 = pnand %p174, %p175
    %p177 = pneg %p176
    // Predicated region
    $region29: #{tpu_custom_call.1} parent=5 // pred_check
      _
    $region30: #{tpu_custom_call.1} parent=5 // pred_check_branch
      %179 = sbr.rel (%p176) target = $region32
    $region31: #{tpu_custom_call.1} parent=5 // pred_region
      %s180 = ssub.s32 %s9, 1
      %s181 = smul.u32 8, %s19
      %p182 = scmp.lt.s32.totalorder %s181, 15
      %s183 = scalar_select %p182, %s181, 15
      %p184 = scmp.lt.s32.totalorder %s18, 0
      %s185 = scalar_select %p184, %s18, 0
      %s186 = sadd.s32 %s185, %s183
      %s187 = smul.addr %s186, 4
      %s188 = scalar_lea.vmem %s0, %s187
      %p189 = pneg %p49
      %p190 = pneg %p46
      %p191 = scmp.lt.s32.totalorder %s18, 0
      %s192 = scalar_select %p191, %s18, 0
      %s193 = smul.addr %s192, 8
      %s194 = scalar_lea.vmem %s1, %s193
      %p195 = pneg %p75
      %p196 = pneg %p72
      %p197 = scmp.lt.s32.totalorder %s18, 0
      %s198 = scalar_select %p197, %s18, 0
      %s199 = smul.addr %s198, 8
      %s200 = scalar_lea.vmem %s2, %s199
      %p201 = pneg %p101
      %p202 = pneg %p98
      %p203 = pneg %p129
      %p204 = pneg %p126
      %s205 = smul.u32 8, %s19
      %p206 = scmp.lt.s32.totalorder %s205, 15
      %s207 = scalar_select %p206, %s205, 15
      %p208 = scmp.lt.s32.totalorder %s18, 0
      %s209 = scalar_select %p208, %s18, 0
      %s210 = smul.addr %s207, 4
      %s211 = sadd.s32 %s209, %s210
      %s212 = smul.addr %s211, 8
      %s213 = scalar_lea.vmem %s3, %s212
      %s214 = smul.u32 8, %s19
      %p215 = scmp.lt.s32.totalorder %s214, 15
      %s216 = scalar_select %p215, %s214, 15
      %p217 = scmp.lt.s32.totalorder %s18, 0
      %s218 = scalar_select %p217, %s18, 0
      %s219 = sadd.s32 %s218, %s216
      %s220 = smul.addr %s219, 4
      %s221 = scalar_lea.vmem %s0, %s220
      %s222 = smul.u32 8, %s19
      %p223 = scmp.lt.s32.totalorder %s18, 0
      %s224 = scalar_select %p223, %s18, 0
      %s225 = smul.addr %s224, 8
      %s226 = scalar_lea.vmem %s1, %s225
      %p227 = scmp.lt.s32.totalorder %s18, 0
      %s228 = scalar_select %p227, %s18, 0
      %s229 = smul.addr %s228, 8
      %s230 = scalar_lea.vmem %s2, %s229
      %s231 = smul.u32 8, %s19
      %p232 = scmp.lt.s32.totalorder %s231, 15
      %s233 = scalar_select %p232, %s231, 15
      %p234 = scmp.lt.s32.totalorder %s18, 0
      %s235 = scalar_select %p234, %s18, 0
      %s236 = smul.addr %s233, 4
      %s237 = sadd.s32 %s235, %s236
      %s238 = smul.addr %s237, 8
      %s239 = scalar_lea.vmem %s3, %s238
      %s240 = smul.u32 8, %s19
      %v241 = vld [vmem:[%s230] sm:$0xff]
      %v242 = vld [vmem:[%s230 + $0x8] sm:$0xff]
      %v243 = vld [vmem:[%s230 + $0x10] sm:$0xff]
      %v244 = vld [vmem:[%s230 + $0x18] sm:$0xff]
      %v245 = vld [vmem:[%s221] sm:$0x1]
      %v246 = vld [vmem:[%s221 + $0x4] sm:$0x1]
      %v247 = vld [vmem:[%s221 + $0x8] sm:$0x1]
      %v248 = vld [vmem:[%s221 + $0xc] sm:$0x1]
      %v249 = vld [vmem:[%s221 + $0x10] sm:$0x1]
      %v250 = vld [vmem:[%s221 + $0x14] sm:$0x1]
      %v251 = vld [vmem:[%s221 + $0x18] sm:$0x1]
      %v252 = vld [vmem:[%s221 + $0x1c] sm:$0x1]
      %v253 = vld [vmem:[%s226] sm:$0xff]
      %v254 = vld [vmem:[%s226 + $0x8] sm:$0xff]
      %v255 = vld [vmem:[%s226 + $0x10] sm:$0xff]
      %v256 = vld [vmem:[%s226 + $0x18] sm:$0xff]
      %v257 = vlaneseq
      %v258 = vshrl.u32 %v257, 7
      %v259 = vsub.s32 0, %v258
      %v260 = vrot.slane %v245, %v259
      %v261 = vlaneseq
      %v262 = vshrl.u32 %v261, 7
      %v263 = vsub.s32 0, %v262
      %v264 = vrot.slane %v246, %v263
      %v265 = vlaneseq
      %v266 = vshrl.u32 %v265, 7
      %v267 = vsub.s32 0, %v266
      %v268 = vrot.slane %v247, %v267
      %v269 = vlaneseq
      %v270 = vshrl.u32 %v269, 7
      %v271 = vsub.s32 0, %v270
      %v272 = vrot.slane %v248, %v271
      %v273 = vlaneseq
      %v274 = vshrl.u32 %v273, 7
      %v275 = vsub.s32 0, %v274
      %v276 = vrot.slane %v249, %v275
      %v277 = vlaneseq
      %v278 = vshrl.u32 %v277, 7
      %v279 = vsub.s32 0, %v278
      %v280 = vrot.slane %v250, %v279
      %v281 = vlaneseq
      %v282 = vshrl.u32 %v281, 7
      %v283 = vsub.s32 0, %v282
      %v284 = vrot.slane %v251, %v283
      %v285 = vlaneseq
      %v286 = vshrl.u32 %v285, 7
      %v287 = vsub.s32 0, %v286
      %v288 = vrot.slane %v252, %v287
      %v289 = vmul.f32 %v260, %v253
      %v290 = vmul.f32 %v260, %v254
      %v291 = vmul.f32 %v260, %v255
      %v292 = vmul.f32 %v260, %v256
      %v293 = vmul.f32 %v264, %v253
      %v294 = vmul.f32 %v264, %v254
      %v295 = vmul.f32 %v264, %v255
      %v296 = vmul.f32 %v264, %v256
      %v297 = vmul.f32 %v268, %v253
      %v298 = vmul.f32 %v268, %v254
      %v299 = vmul.f32 %v268, %v255
      %v300 = vmul.f32 %v268, %v256
      %v301 = vmul.f32 %v272, %v253
      %v302 = vmul.f32 %v272, %v254
      %v303 = vmul.f32 %v272, %v255
      %v304 = vmul.f32 %v272, %v256
      %v305 = vmul.f32 %v276, %v253
      %v306 = vmul.f32 %v276, %v254
      %v307 = vmul.f32 %v276, %v255
      %v308 = vmul.f32 %v276, %v256
      %v309 = vmul.f32 %v280, %v253
      %v310 = vmul.f32 %v280, %v254
      %v311 = vmul.f32 %v280, %v255
      %v312 = vmul.f32 %v280, %v256
      %v313 = vmul.f32 %v284, %v253
      %v314 = vmul.f32 %v284, %v254
      %v315 = vmul.f32 %v284, %v255
      %v316 = vmul.f32 %v284, %v256
      %v317 = vmul.f32 %v288, %v253
      %v318 = vmul.f32 %v288, %v254
      %v319 = vmul.f32 %v288, %v255
      %v320 = vmul.f32 %v288, %v256
      %v321 = vadd.f32 %v241, %v289
      %v322 = vadd.f32 %v242, %v290
      %v323 = vadd.f32 %v243, %v291
      %v324 = vadd.f32 %v244, %v292
      %v325 = vadd.f32 %v241, %v293
      %v326 = vadd.f32 %v242, %v294
      %v327 = vadd.f32 %v243, %v295
      %v328 = vadd.f32 %v244, %v296
      %v329 = vadd.f32 %v241, %v297
      %v330 = vadd.f32 %v242, %v298
      %v331 = vadd.f32 %v243, %v299
      %v332 = vadd.f32 %v244, %v300
      %v333 = vadd.f32 %v241, %v301
      %v334 = vadd.f32 %v242, %v302
      %v335 = vadd.f32 %v243, %v303
      %v336 = vadd.f32 %v244, %v304
      %v337 = vadd.f32 %v241, %v305
      %v338 = vadd.f32 %v242, %v306
      %v339 = vadd.f32 %v243, %v307
      %v340 = vadd.f32 %v244, %v308
      %v341 = vadd.f32 %v241, %v309
      %v342 = vadd.f32 %v242, %v310
      %v343 = vadd.f32 %v243, %v311
      %v344 = vadd.f32 %v244, %v312
      %v345 = vadd.f32 %v241, %v313
      %v346 = vadd.f32 %v242, %v314
      %v347 = vadd.f32 %v243, %v315
      %v348 = vadd.f32 %v244, %v316
      %v349 = vadd.f32 %v241, %v317
      %v350 = vadd.f32 %v242, %v318
      %v351 = vadd.f32 %v243, %v319
      %v352 = vadd.f32 %v244, %v320
      %v353 = vld [vmem:[%s221 + $0x1] sm:$0x1]
      %v354 = vld [vmem:[%s221 + $0x5] sm:$0x1]
      %v355 = vld [vmem:[%s221 + $0x9] sm:$0x1]
      %v356 = vld [vmem:[%s221 + $0xd] sm:$0x1]
      %v357 = vld [vmem:[%s221 + $0x11] sm:$0x1]
      %v358 = vld [vmem:[%s221 + $0x15] sm:$0x1]
      %v359 = vld [vmem:[%s221 + $0x19] sm:$0x1]
      %v360 = vld [vmem:[%s221 + $0x1d] sm:$0x1]
      %s361 = scalar_lea.vmem %s226, 32
      %v362 = vld [vmem:[%s361] sm:$0xff]
      %v363 = vld [vmem:[%s361 + $0x8] sm:$0xff]
      %v364 = vld [vmem:[%s361 + $0x10] sm:$0xff]
      %v365 = vld [vmem:[%s361 + $0x18] sm:$0xff]
      %v366 = vlaneseq
      %v367 = vshrl.u32 %v366, 7
      %v368 = vsub.s32 0, %v367
      %v369 = vrot.slane %v353, %v368
      %v370 = vlaneseq
      %v371 = vshrl.u32 %v370, 7
      %v372 = vsub.s32 0, %v371
      %v373 = vrot.slane %v354, %v372
      %v374 = vlaneseq
      %v375 = vshrl.u32 %v374, 7
      %v376 = vsub.s32 0, %v375
      %v377 = vrot.slane %v355, %v376
      %v378 = vlaneseq
      %v379 = vshrl.u32 %v378, 7
      %v380 = vsub.s32 0, %v379
      %v381 = vrot.slane %v356, %v380
      %v382 = vlaneseq
      %v383 = vshrl.u32 %v382, 7
      %v384 = vsub.s32 0, %v383
      %v385 = vrot.slane %v357, %v384
      %v386 = vlaneseq
      %v387 = vshrl.u32 %v386, 7
      %v388 = vsub.s32 0, %v387
      %v389 = vrot.slane %v358, %v388
      %v390 = vlaneseq
      %v391 = vshrl.u32 %v390, 7
      %v392 = vsub.s32 0, %v391
      %v393 = vrot.slane %v359, %v392
      %v394 = vlaneseq
      %v395 = vshrl.u32 %v394, 7
      %v396 = vsub.s32 0, %v395
      %v397 = vrot.slane %v360, %v396
      %v398 = vmul.f32 %v369, %v362
      %v399 = vmul.f32 %v369, %v363
      %v400 = vmul.f32 %v369, %v364
      %v401 = vmul.f32 %v369, %v365
      %v402 = vmul.f32 %v373, %v362
      %v403 = vmul.f32 %v373, %v363
      %v404 = vmul.f32 %v373, %v364
      %v405 = vmul.f32 %v373, %v365
      %v406 = vmul.f32 %v377, %v362
      %v407 = vmul.f32 %v377, %v363
      %v408 = vmul.f32 %v377, %v364
      %v409 = vmul.f32 %v377, %v365
      %v410 = vmul.f32 %v381, %v362
      %v411 = vmul.f32 %v381, %v363
      %v412 = vmul.f32 %v381, %v364
      %v413 = vmul.f32 %v381, %v365
      %v414 = vmul.f32 %v385, %v362
      %v415 = vmul.f32 %v385, %v363
      %v416 = vmul.f32 %v385, %v364
      %v417 = vmul.f32 %v385, %v365
      %v418 = vmul.f32 %v389, %v362
      %v419 = vmul.f32 %v389, %v363
      %v420 = vmul.f32 %v389, %v364
      %v421 = vmul.f32 %v389, %v365
      %v422 = vmul.f32 %v393, %v362
      %v423 = vmul.f32 %v393, %v363
      %v424 = vmul.f32 %v393, %v364
      %v425 = vmul.f32 %v393, %v365
      %v426 = vmul.f32 %v397, %v362
      %v427 = vmul.f32 %v397, %v363
      %v428 = vmul.f32 %v397, %v364
      %v429 = vmul.f32 %v397, %v365
      %v430 = vadd.f32 %v321, %v398
      %v431 = vadd.f32 %v322, %v399
      %v432 = vadd.f32 %v323, %v400
      %v433 = vadd.f32 %v324, %v401
      %v434 = vadd.f32 %v325, %v402
      %v435 = vadd.f32 %v326, %v403
      %v436 = vadd.f32 %v327, %v404
      %v437 = vadd.f32 %v328, %v405
      %v438 = vadd.f32 %v329, %v406
      %v439 = vadd.f32 %v330, %v407
      %v440 = vadd.f32 %v331, %v408
      %v441 = vadd.f32 %v332, %v409
      %v442 = vadd.f32 %v333, %v410
      %v443 = vadd.f32 %v334, %v411
      %v444 = vadd.f32 %v335, %v412
      %v445 = vadd.f32 %v336, %v413
      %v446 = vadd.f32 %v337, %v414
      %v447 = vadd.f32 %v338, %v415
      %v448 = vadd.f32 %v339, %v416
      %v449 = vadd.f32 %v340, %v417
      %v450 = vadd.f32 %v341, %v418
      %v451 = vadd.f32 %v342, %v419
      %v452 = vadd.f32 %v343, %v420
      %v453 = vadd.f32 %v344, %v421
      %v454 = vadd.f32 %v345, %v422
      %v455 = vadd.f32 %v346, %v423
      %v456 = vadd.f32 %v347, %v424
      %v457 = vadd.f32 %v348, %v425
      %v458 = vadd.f32 %v349, %v426
      %v459 = vadd.f32 %v350, %v427
      %v460 = vadd.f32 %v351, %v428
      %v461 = vadd.f32 %v352, %v429
      %v462 = vld [vmem:[%s221 + $0x2] sm:$0x1]
      %v463 = vld [vmem:[%s221 + $0x6] sm:$0x1]
      %v464 = vld [vmem:[%s221 + $0xa] sm:$0x1]
      %v465 = vld [vmem:[%s221 + $0xe] sm:$0x1]
      %v466 = vld [vmem:[%s221 + $0x12] sm:$0x1]
      %v467 = vld [vmem:[%s221 + $0x16] sm:$0x1]
      %v468 = vld [vmem:[%s221 + $0x1a] sm:$0x1]
      %v469 = vld [vmem:[%s221 + $0x1e] sm:$0x1]
      %s470 = scalar_lea.vmem %s226, 64
      %v471 = vld [vmem:[%s470] sm:$0xff]
      %v472 = vld [vmem:[%s470 + $0x8] sm:$0xff]
      %v473 = vld [vmem:[%s470 + $0x10] sm:$0xff]
      %v474 = vld [vmem:[%s470 + $0x18] sm:$0xff]
      %v475 = vlaneseq
      %v476 = vshrl.u32 %v475, 7
      %v477 = vsub.s32 0, %v476
      %v478 = vrot.slane %v462, %v477
      %v479 = vlaneseq
      %v480 = vshrl.u32 %v479, 7
      %v481 = vsub.s32 0, %v480
      %v482 = vrot.slane %v463, %v481
      %v483 = vlaneseq
      %v484 = vshrl.u32 %v483, 7
      %v485 = vsub.s32 0, %v484
      %v486 = vrot.slane %v464, %v485
      %v487 = vlaneseq
      %v488 = vshrl.u32 %v487, 7
      %v489 = vsub.s32 0, %v488
      %v490 = vrot.slane %v465, %v489
      %v491 = vlaneseq
      %v492 = vshrl.u32 %v491, 7
      %v493 = vsub.s32 0, %v492
      %v494 = vrot.slane %v466, %v493
      %v495 = vlaneseq
      %v496 = vshrl.u32 %v495, 7
      %v497 = vsub.s32 0, %v496
      %v498 = vrot.slane %v467, %v497
      %v499 = vlaneseq
      %v500 = vshrl.u32 %v499, 7
      %v501 = vsub.s32 0, %v500
      %v502 = vrot.slane %v468, %v501
      %v503 = vlaneseq
      %v504 = vshrl.u32 %v503, 7
      %v505 = vsub.s32 0, %v504
      %v506 = vrot.slane %v469, %v505
      %v507 = vmul.f32 %v478, %v471
      %v508 = vmul.f32 %v478, %v472
      %v509 = vmul.f32 %v478, %v473
      %v510 = vmul.f32 %v478, %v474
      %v511 = vmul.f32 %v482, %v471
      %v512 = vmul.f32 %v482, %v472
      %v513 = vmul.f32 %v482, %v473
      %v514 = vmul.f32 %v482, %v474
      %v515 = vmul.f32 %v486, %v471
      %v516 = vmul.f32 %v486, %v472
      %v517 = vmul.f32 %v486, %v473
      %v518 = vmul.f32 %v486, %v474
      %v519 = vmul.f32 %v490, %v471
      %v520 = vmul.f32 %v490, %v472
      %v521 = vmul.f32 %v490, %v473
      %v522 = vmul.f32 %v490, %v474
      %v523 = vmul.f32 %v494, %v471
      %v524 = vmul.f32 %v494, %v472
      %v525 = vmul.f32 %v494, %v473
      %v526 = vmul.f32 %v494, %v474
      %v527 = vmul.f32 %v498, %v471
      %v528 = vmul.f32 %v498, %v472
      %v529 = vmul.f32 %v498, %v473
      %v530 = vmul.f32 %v498, %v474
      %v531 = vmul.f32 %v502, %v471
      %v532 = vmul.f32 %v502, %v472
      %v533 = vmul.f32 %v502, %v473
      %v534 = vmul.f32 %v502, %v474
      %v535 = vmul.f32 %v506, %v471
      %v536 = vmul.f32 %v506, %v472
      %v537 = vmul.f32 %v506, %v473
      %v538 = vmul.f32 %v506, %v474
      %v539 = vadd.f32 %v430, %v507
      %v540 = vadd.f32 %v431, %v508
      %v541 = vadd.f32 %v432, %v509
      %v542 = vadd.f32 %v433, %v510
      %v543 = vadd.f32 %v434, %v511
      %v544 = vadd.f32 %v435, %v512
      %v545 = vadd.f32 %v436, %v513
      %v546 = vadd.f32 %v437, %v514
      %v547 = vadd.f32 %v438, %v515
      %v548 = vadd.f32 %v439, %v516
      %v549 = vadd.f32 %v440, %v517
      %v550 = vadd.f32 %v441, %v518
      %v551 = vadd.f32 %v442, %v519
      %v552 = vadd.f32 %v443, %v520
      %v553 = vadd.f32 %v444, %v521
      %v554 = vadd.f32 %v445, %v522
      %v555 = vadd.f32 %v446, %v523
      %v556 = vadd.f32 %v447, %v524
      %v557 = vadd.f32 %v448, %v525
      %v558 = vadd.f32 %v449, %v526
      %v559 = vadd.f32 %v450, %v527
      %v560 = vadd.f32 %v451, %v528
      %v561 = vadd.f32 %v452, %v529
      %v562 = vadd.f32 %v453, %v530
      %v563 = vadd.f32 %v454, %v531
      %v564 = vadd.f32 %v455, %v532
      %v565 = vadd.f32 %v456, %v533
      %v566 = vadd.f32 %v457, %v534
      %v567 = vadd.f32 %v458, %v535
      %v568 = vadd.f32 %v459, %v536
      %v569 = vadd.f32 %v460, %v537
      %v570 = vadd.f32 %v461, %v538
      %vm571 = vcmask 130048
      %572 = vst.msk [vmem:[%s239] sm:$0xff] %vm571, %v539
      %573 = vst.msk [vmem:[%s239 + $0x8] sm:$0xff] %vm571, %v540
      %574 = vst.msk [vmem:[%s239 + $0x10] sm:$0xff] %vm571, %v541
      %575 = vst.msk [vmem:[%s239 + $0x18] sm:$0xff] %vm571, %v542
      %576 = vst.msk [vmem:[%s239 + $0x20] sm:$0xff] %vm571, %v543
      %577 = vst.msk [vmem:[%s239 + $0x28] sm:$0xff] %vm571, %v544
      %578 = vst.msk [vmem:[%s239 + $0x30] sm:$0xff] %vm571, %v545
      %579 = vst.msk [vmem:[%s239 + $0x38] sm:$0xff] %vm571, %v546
      %580 = vst.msk [vmem:[%s239 + $0x40] sm:$0xff] %vm571, %v547
      %581 = vst.msk [vmem:[%s239 + $0x48] sm:$0xff] %vm571, %v548
      %582 = vst.msk [vmem:[%s239 + $0x50] sm:$0xff] %vm571, %v549
      %583 = vst.msk [vmem:[%s239 + $0x58] sm:$0xff] %vm571, %v550
      %584 = vst.msk [vmem:[%s239 + $0x60] sm:$0xff] %vm571, %v551
      %585 = vst.msk [vmem:[%s239 + $0x68] sm:$0xff] %vm571, %v552
      %586 = vst.msk [vmem:[%s239 + $0x70] sm:$0xff] %vm571, %v553
      %587 = vst.msk [vmem:[%s239 + $0x78] sm:$0xff] %vm571, %v554
      %588 = vst.msk [vmem:[%s239 + $0x80] sm:$0xff] %vm571, %v555
      %589 = vst.msk [vmem:[%s239 + $0x88] sm:$0xff] %vm571, %v556
      %590 = vst.msk [vmem:[%s239 + $0x90] sm:$0xff] %vm571, %v557
      %591 = vst.msk [vmem:[%s239 + $0x98] sm:$0xff] %vm571, %v558
      %592 = vst.msk [vmem:[%s239 + $0xa0] sm:$0xff] %vm571, %v559
      %593 = vst.msk [vmem:[%s239 + $0xa8] sm:$0xff] %vm571, %v560
      %594 = vst.msk [vmem:[%s239 + $0xb0] sm:$0xff] %vm571, %v561
      %595 = vst.msk [vmem:[%s239 + $0xb8] sm:$0xff] %vm571, %v562
      %596 = vst.msk [vmem:[%s239 + $0xc0] sm:$0xff] %vm571, %v563
      %597 = vst.msk [vmem:[%s239 + $0xc8] sm:$0xff] %vm571, %v564
      %598 = vst.msk [vmem:[%s239 + $0xd0] sm:$0xff] %vm571, %v565
      %599 = vst.msk [vmem:[%s239 + $0xd8] sm:$0xff] %vm571, %v566
      %600 = vst.msk [vmem:[%s239 + $0xe0] sm:$0xff] %vm571, %v567
      %601 = vst.msk [vmem:[%s239 + $0xe8] sm:$0xff] %vm571, %v568
      %602 = vst.msk [vmem:[%s239 + $0xf0] sm:$0xff] %vm571, %v569
      %603 = vst.msk [vmem:[%s239 + $0xf8] sm:$0xff] %vm571, %v570
      %s604 = smul.u32 8, %s19
      %p605 = scmp.lt.s32.totalorder %s604, 15
      %s606 = scalar_select %p605, %s604, 15
      %p607 = scmp.lt.s32.totalorder %s18, 0
      %s608 = scalar_select %p607, %s18, 0
      %s609 = smul.addr %s606, 4
      %s610 = sadd.s32 %s608, %s609
      %s611 = smul.addr %s610, 8
      %s612 = scalar_lea.vmem %s3, %s611
      // Predicated region
      $region33: #{tpu_custom_call.1} parent=31 // pred_check
        %p613 = pneg %p126
      $region34: #{tpu_custom_call.1} parent=31 // pred_check_branch
        %615 = sbr.rel (%p613) target = $region36
      $region35: #{tpu_custom_call.1} parent=31 // pred_region
        %s616 = smul.u32 8, %s19
      $region36: #{tpu_custom_call.1} parent=31 // pred_fallthru
        _
    $region32: #{tpu_custom_call.1} parent=5 // pred_fallthru
      _
    %p617 = scmp.le.s32.totalorder 2, %s9
    // Predicated region
    $region37: #{tpu_custom_call.1} parent=5 // pred_check
      %p618 = pneg %p617
    $region38: #{tpu_custom_call.1} parent=5 // pred_check_branch
      %620 = sbr.rel (%p618) target = $region40
    $region39: #{tpu_custom_call.1} parent=5 // pred_region
      %s621 = ssub.s32 %s9, 2
      // Predicated region
      $region41: #{tpu_custom_call.1} parent=39 // pred_check
        %p622 = pneg %p132
      $region42: #{tpu_custom_call.1} parent=39 // pred_check_branch
        %624 = sbr.rel (%p622) target = $region44
      $region43: #{tpu_custom_call.1} parent=39 // pred_region
        %s625 = smul.u32 8, %s21
        %p626 = scmp.lt.s32.totalorder %s625, 15
        %s627 = scalar_select %p626, %s625, 15
        %p628 = scmp.lt.s32.totalorder %s20, 0
        %s629 = scalar_select %p628, %s20, 0
        %s630 = smul.addr %s627, 4
        %s631 = sadd.s32 %s629, %s630
        %s632 = smul.addr %s631, 8
        %s633 = scalar_lea.vmem %s3, %s632
      $region44: #{tpu_custom_call.1} parent=39 // pred_fallthru
        _
    $region40: #{tpu_custom_call.1} parent=5 // pred_fallthru
      _
  $region6: #{tpu_custom_call.1} parent=0 // loop_footer
    %s13 = sadd.s32 1, %s9
  $region7: #{tpu_custom_call.1} parent=0 // loop_footer_branch
    %8 = sbr.rel target = $region3
  $region8: #{tpu_custom_call.1} parent=0 // loop_exit
    _

</llo_original>
